<compile_context>
chip_gen: v7x
topology: tpu7x:2x2x1
jax: 0.10.0
libtpu: 0.0.40
codegen_flags: <defaults>
</compile_context>

<pallas_src>
import functools

import jax
import jax.numpy as jnp
from jax.experimental import pallas as pl
from jax.experimental.pallas import tpu as pltpu

LANES = 128
SUBLANES = 8
TILE_ELEMS = SUBLANES * LANES            # one (8, 128) f32 vreg
MAX_BLOCK_ROWS = 4096                    # (4096, 128) f32 = 2 MiB per input buffer
VMEM_LIMIT_BYTES = 32 * 1024 * 1024      # > v5e 16 MiB default, <= v7x 64 MiB physical


def _round_up(a, b):
    return -(-a // b) * b


def _cdiv(a, b):
    return -(-a // b)


@functools.lru_cache(maxsize=None)
def _num_tensorcores():
    """TensorCores per Pallas device: 2 on v7x, 1 on v5e/v6e.  Conservative fallback: 1."""
    try:
        info = pltpu.get_tpu_info()
        for name in ("num_cores", "core_count", "num_tensorcores",
                     "tensor_core_count", "cores_per_chip"):
            v = getattr(info, name, None)
            if isinstance(v, int) and 1 <= v <= 8:
                return v
    except Exception:
        pass
    try:
        kind = jax.devices()[0].device_kind.lower()
    except Exception:
        return 1
    return 2 if ("v7" in kind or "7x" in kind) else 1


def _vreg_fold(a):
    """(R, 128) f32 -> (8, 128) by summing groups of 8 rows.

    The reshape only splits the sublane axis into whole (8, 128) vregs (free layout);
    the sum over the leading axis is plain vreg-aligned VPU adds -- no XLU reduce.
    """
    rows = a.shape[0]
    if rows == SUBLANES:
        return a
    return a.reshape(rows // SUBLANES, SUBLANES, LANES).sum(axis=0)


def _focal_loss_kernel(x_ref, t_ref, o_ref, *, alpha, gamma, pos_weight,
                       binary_targets, blocks_per_core, rows_total):
    """Elementwise focal loss, folded per step into a resident (1, 8, 128) accumulator."""
    c = pl.program_id(0)                 # core split (parallel axis)
    i = pl.program_id(1)                 # row-block within this split (reduction axis)
    block_rows = x_ref.shape[0]

    @pl.when(i == 0)
    def _init():
        o_ref[...] = jnp.zeros_like(o_ref)

    # Stream in native dtype, upcast on-chip.
    x = x_ref[...].astype(jnp.float32)
    t = t_ref[...].astype(jnp.float32)

    # Numerically-stable BCE-with-logits (matches PyTorch), pos_weight folded in.
    e_abs = jnp.exp(-jnp.abs(x))                               # EUP: exp
    softplus_neg = jnp.maximum(-x, 0.0) + jnp.log1p(e_abs)     # EUP: log
    if pos_weight == 1.0:
        bce = (1.0 - t) * x + softplus_neg
    else:
        bce = (1.0 - t) * x + (1.0 + (pos_weight - 1.0) * t) * softplus_neg

    if binary_targets and pos_weight == 1.0:
        # Fast path, exact for t in {0, 1}: pt = sigmoid((2t-1)*x), rebuilt from the
        # already-computed exp(-|x|).  Replaces the second full exp with one divide
        # (vrcp + Newton on the VPU), cutting heavy transcendentals to {exp, log, sqrt}
        # -- the main win on v7x where this kernel is EUP-bound; neutral on v5e/v6e.
        s_hi = 1.0 / (1.0 + e_abs)         # sigmoid(|x|)          in [0.5, 1)
        s_lo = e_abs * s_hi                # 1 - sigmoid(|x|), no cancellation
        agree = (x >= 0.0) == (t > 0.5)
        pt = jnp.where(agree, s_hi, s_lo)
        z = jnp.where(agree, s_lo, s_hi)   # exact 1 - pt
    else:
        pt = jnp.exp(-bce)                 # EUP: exp  (general / soft-target path)
        z = 1.0 - pt
    # NOTE: like PyTorch, (1 - pt)**gamma is NaN if bce < 0 (only possible for targets
    # outside [0, 1] or negative pos_weight).

    if gamma == 1.5:
        focal_w = z * jnp.sqrt(z)          # EUP: sqrt -- avoids generic pow (= exp(log))
    elif float(gamma).is_integer() and gamma >= 0:
        focal_w = z ** int(gamma)
    else:
        focal_w = z ** gamma               # generic fallback
    focal = alpha * focal_w * bce

    block_idx = c * blocks_per_core + i    # logical row-block index over the whole array
    is_clean = (block_idx + 1) * block_rows <= rows_total

    @pl.when(is_clean)
    def _accumulate():
        o_ref[0] += _vreg_fold(focal)

    @pl.when(jnp.logical_not(is_clean))
    def _accumulate_masked():
        # Partial / duplicated tail block: rows past the real data hold unspecified
        # values; jnp.where is a select, so NaN/Inf there does not propagate.
        row = jax.lax.broadcasted_iota(jnp.int32, focal.shape, 0)
        valid = (block_idx * block_rows + row) < rows_total
        o_ref[0] += _vreg_fold(jnp.where(valid, focal, 0.0))


def _focal_sum_pallas(x2d, t2d, *, alpha, gamma, pos_weight, binary_targets,
                      max_block_rows, num_splits):
    """Sum (not mean) of the focal loss over a (rows, 128) view; rows % 8 == 0."""
    rows = x2d.shape[0]
    assert rows % SUBLANES == 0 and max_block_rows % SUBLANES == 0

    block_rows = min(max_block_rows, _round_up(_cdiv(rows, num_splits), SUBLANES))
    blocks_total = _cdiv(rows, block_rows)
    blocks_per_core = _cdiv(blocks_total, num_splits)

    def in_map(c, i):
        # Clamp so a core split with no remaining real blocks re-reads the last block;
        # its contribution is fully masked out inside the kernel.
        return (jnp.minimum(c * blocks_per_core + i, blocks_total - 1), 0)

    tile_spec = pl.BlockSpec((block_rows, LANES), in_map)
    out_spec = pl.BlockSpec((1, SUBLANES, LANES), lambda c, i: (c, 0, 0))

    kernel = functools.partial(
        _focal_loss_kernel,
        alpha=float(alpha), gamma=float(gamma), pos_weight=float(pos_weight),
        binary_targets=bool(binary_targets),
        blocks_per_core=blocks_per_core, rows_total=rows)

    partial_sums = pl.pallas_call(
        kernel,
        out_shape=jax.ShapeDtypeStruct((num_splits, SUBLANES, LANES), jnp.float32),
        grid_spec=pltpu.PrefetchScalarGridSpec(
            num_scalar_prefetch=0,
            grid=(num_splits, blocks_per_core),
            in_specs=[tile_spec, tile_spec],
            out_specs=out_spec,
            scratch_shapes=[],
        ),
        compiler_params=pltpu.CompilerParams(
            dimension_semantics=("parallel", "arbitrary"),
            vmem_limit_bytes=VMEM_LIMIT_BYTES,
        ),
    )(x2d, t2d)

    # Final reduce over <= num_splits * 8 * 128 f32 (<= 8 KiB) -- trivial XLA op.
    return jnp.sum(partial_sums)


def _focal_elements_jax(x, t, *, alpha, gamma, pos_weight):
    """Reference elementwise focal loss (also used for the tiny ragged-tail epilogue)."""
    x = x.astype(jnp.float32)
    t = t.astype(jnp.float32)
    softplus_neg = jnp.maximum(-x, 0.0) + jnp.log1p(jnp.exp(-jnp.abs(x)))
    bce = (1.0 - t) * x + (1.0 + (pos_weight - 1.0) * t) * softplus_neg
    pt = jnp.exp(-bce)
    return alpha * (1.0 - pt) ** gamma * bce


def focal_loss(inputs, targets, *, alpha=2.0, gamma=1.5, pos_weight=1.0,
               assume_binary_targets=True, max_block_rows=None, num_splits=None):
    """Pallas TPU implementation of FocalLoss.forward.  Returns an f32 scalar.

    assume_binary_targets=True enables the 3-transcendental fast path (exact for
    t in {0,1} with pos_weight == 1); set False for soft targets.
    """
    assert inputs.shape == targets.shape
    n_total = int(inputs.size)
    assert n_total > 0
    if max_block_rows is None:
        max_block_rows = MAX_BLOCK_ROWS
    if num_splits is None:
        num_splits = _num_tensorcores()

    x_flat = jnp.ravel(inputs)
    t_flat = jnp.ravel(targets)

    n_main = (n_total // TILE_ELEMS) * TILE_ELEMS   # (8,128)-aligned prefix
    total = jnp.float32(0.0)

    if n_main:
        if n_main == n_total:
            x_main, t_main = x_flat, t_flat          # zero-copy reshape below
        else:
            # TODO(synk): the prefix slice still materializes one copy of the aligned
            # part (XLA slice); a ragged-aware manual-DMA path would avoid it.  The
            # ragged tail itself is handled without padding/copying the whole tensor.
            x_main, t_main = x_flat[:n_main], t_flat[:n_main]
        total = total + _focal_sum_pallas(
            x_main.reshape(-1, LANES), t_main.reshape(-1, LANES),
            alpha=alpha, gamma=gamma, pos_weight=pos_weight,
            binary_targets=assume_binary_targets,
            max_block_rows=max_block_rows, num_splits=num_splits)

    if n_main != n_total:
        # < 1024-element ragged tail: one tiny fused pure-JAX epilogue.
        total = total + jnp.sum(_focal_elements_jax(
            x_flat[n_main:], t_flat[n_main:],
            alpha=alpha, gamma=gamma, pos_weight=pos_weight))

    return total / jnp.float32(n_total)


def _reference_focal_loss(x, t, *, alpha=2.0, gamma=1.5, pos_weight=1.0):
    return jnp.mean(_focal_elements_jax(x, t, alpha=alpha, gamma=gamma,
                                        pos_weight=pos_weight))


if __name__ == "__main__":
    key = jax.random.PRNGKey(0)
    ks = jax.random.split(key, 10)

    def check(loss, ref, tag, rtol=1e-5, atol=1e-6):
        assert jnp.allclose(loss, ref, rtol=rtol, atol=atol), (tag, loss, ref)

    # 1) Aligned NCHW logits / binary targets at the module's implied small shape.
    x = jax.random.normal(ks[0], (2, 4, 16, 16), dtype=jnp.float32)
    t = (jax.random.uniform(ks[1], (2, 4, 16, 16)) > 0.5).astype(jnp.float32)
    loss = jax.block_until_ready(focal_loss(x, t))
    check(loss, _reference_focal_loss(x, t), "aligned")

    # 2) Element count not a multiple of 1024 -> aligned-prefix kernel + JAX tail.
    x2 = jax.random.normal(ks[2], (2, 3, 15, 17), dtype=jnp.float32)
    t2 = (jax.random.uniform(ks[3], (2, 3, 15, 17)) > 0.5).astype(jnp.float32)
    loss2 = jax.block_until_ready(focal_loss(x2, t2))
    check(loss2, _reference_focal_loss(x2, t2), "ragged tail")

    # 3) Forced 2 splits + tiny block -> exercises the in-kernel row mask and the
    #    clamped duplicate block on any chip generation.
    x3 = jax.random.normal(ks[4], (2, 4, 16, 40), dtype=jnp.float32)
    t3 = (jax.random.uniform(ks[5], (2, 4, 16, 40)) > 0.5).astype(jnp.float32)
    loss3 = jax.block_until_ready(focal_loss(x3, t3, max_block_rows=16, num_splits=2))
    check(loss3, _reference_focal_loss(x3, t3), "masked block")

    # 4) Soft (non-binary) targets -> general exp(-bce) path.
    x4 = jax.random.normal(ks[6], (2, 4, 16, 16), dtype=jnp.float32)
    t4 = jax.random.uniform(ks[7], (2, 4, 16, 16), dtype=jnp.float32)
    loss4 = jax.block_until_ready(focal_loss(x4, t4, assume_binary_targets=False))
    check(loss4, _reference_focal_loss(x4, t4), "soft targets")

    # 5) pos_weight != 1 with binary targets (general path regardless of the flag).
    x5 = jax.random.normal(ks[8], (2, 4, 16, 16), dtype=jnp.float32)
    t5 = (jax.random.uniform(ks[9], (2, 4, 16, 16)) > 0.5).astype(jnp.float32)
    loss5 = jax.block_until_ready(focal_loss(x5, t5, pos_weight=2.5))
    check(loss5, _reference_focal_loss(x5, t5, pos_weight=2.5), "pos_weight")

    print("KERNEL_OK")
</pallas_src>

<mosaic_0001>
module attributes {stable_mosaic.version = 11 : i64} {
  func.func @_focal_loss_kernel(%arg0: i32, %arg1: i32, %arg2: memref<16x128xf32, #tpu.memory_space<vmem>>, %arg3: memref<16x128xf32, #tpu.memory_space<vmem>>, %arg4: memref<1x8x128xf32, #tpu.memory_space<vmem>>) attributes {dimension_semantics = [#tpu.dimension_semantics<parallel>, #tpu.dimension_semantics<arbitrary>], iteration_bounds = array<i64: 1, 1>, scalar_prefetch = 0 : i64, scratch_operands = 0 : i64, tpu.core_type = #tpu.core_type<tc>, window_params = [{transform_indices = @transform_0, window_bounds = array<i64: 16, 128>}, {transform_indices = @transform_1, window_bounds = array<i64: 16, 128>}, {transform_indices = @transform_2, window_bounds = array<i64: 1, 8, 128>}]} {
    %c0_i32 = arith.constant 0 : i32
    %0 = arith.cmpi eq, %arg1, %c0_i32 : i32
    %1 = arith.extui %0 : i1 to i32
    %c0_i32_0 = arith.constant 0 : i32
    %2 = arith.cmpi ne, %1, %c0_i32_0 : i32
    scf.if %2 {
      %cst_17 = arith.constant 0.000000e+00 : f32
      %46 = vector.broadcast %cst_17 : f32 to vector<1x8x128xf32>
      %c0_18 = arith.constant 0 : index
      %c0_19 = arith.constant 0 : index
      %c0_20 = arith.constant 0 : index
      %47 = vector.load %arg4[%c0_18, %c0_19, %c0_20] : memref<1x8x128xf32, #tpu.memory_space<vmem>>, vector<1x8x128xf32>
      tpu.vector_store %arg4[%c0_18, %c0_19, %c0_20], %46 {strides = array<i32>} : memref<1x8x128xf32, #tpu.memory_space<vmem>>, vector<1x8x128xf32>,
    } else {
    }
    %c0 = arith.constant 0 : index
    %c0_1 = arith.constant 0 : index
    %3 = vector.load %arg2[%c0, %c0_1] : memref<16x128xf32, #tpu.memory_space<vmem>>, vector<16x128xf32>
    %c0_2 = arith.constant 0 : index
    %c0_3 = arith.constant 0 : index
    %4 = vector.load %arg3[%c0_2, %c0_3] : memref<16x128xf32, #tpu.memory_space<vmem>>, vector<16x128xf32>
    %5 = math.absf %3 : vector<16x128xf32>
    %cst = arith.constant 0.000000e+00 : f32
    %6 = vector.broadcast %cst : f32 to vector<16x128xf32>
    %7 = arith.subf %6, %5 : vector<16x128xf32>
    %8 = math.exp %7 : vector<16x128xf32>
    %cst_4 = arith.constant 0.000000e+00 : f32
    %9 = vector.broadcast %cst_4 : f32 to vector<16x128xf32>
    %10 = arith.subf %9, %3 : vector<16x128xf32>
    %cst_5 = arith.constant 0.000000e+00 : f32
    %11 = vector.broadcast %cst_5 : f32 to vector<16x128xf32>
    %12 = arith.maximumf %10, %11 : vector<16x128xf32>
    %13 = math.log1p %8 : vector<16x128xf32>
    %14 = arith.addf %12, %13 : vector<16x128xf32>
    %cst_6 = arith.constant 1.000000e+00 : f32
    %15 = vector.broadcast %cst_6 : f32 to vector<16x128xf32>
    %16 = arith.subf %15, %4 : vector<16x128xf32>
    %17 = arith.mulf %16, %3 : vector<16x128xf32>
    %18 = arith.addf %17, %14 : vector<16x128xf32>
    %cst_7 = arith.constant 1.000000e+00 : f32
    %19 = vector.broadcast %cst_7 : f32 to vector<16x128xf32>
    %20 = arith.addf %19, %8 : vector<16x128xf32>
    %cst_8 = arith.constant 1.000000e+00 : f32
    %21 = vector.broadcast %cst_8 : f32 to vector<16x128xf32>
    %22 = arith.divf %21, %20 : vector<16x128xf32>
    %23 = arith.mulf %8, %22 : vector<16x128xf32>
    %cst_9 = arith.constant 0.000000e+00 : f32
    %24 = vector.broadcast %cst_9 : f32 to vector<16x128xf32>
    %25 = arith.cmpf oge, %3, %24 : vector<16x128xf32>
    %cst_10 = arith.constant 5.000000e-01 : f32
    %26 = vector.broadcast %cst_10 : f32 to vector<16x128xf32>
    %27 = arith.cmpf ogt, %4, %26 : vector<16x128xf32>
    %28 = arith.xori %25, %27 : vector<16x128xi1>
    %cst_11 = arith.constant dense<true> : vector<16x128xi1>
    %29 = arith.xori %28, %cst_11 : vector<16x128xi1>
    %30 = arith.select %29, %23, %22 : vector<16x128xi1>, vector<16x128xf32>
    %31 = math.sqrt %30 : vector<16x128xf32>
    %32 = arith.mulf %30, %31 : vector<16x128xf32>
    %cst_12 = arith.constant 2.000000e+00 : f32
    %33 = vector.broadcast %cst_12 : f32 to vector<16x128xf32>
    %34 = arith.mulf %33, %32 : vector<16x128xf32>
    %35 = arith.mulf %34, %18 : vector<16x128xf32>
    %c1_i32 = arith.constant 1 : i32
    %36 = arith.muli %arg0, %c1_i32 : i32
    %37 = arith.addi %36, %arg1 : i32
    %c1_i32_13 = arith.constant 1 : i32
    %38 = arith.addi %37, %c1_i32_13 : i32
    %c16_i32 = arith.constant 16 : i32
    %39 = arith.muli %38, %c16_i32 : i32
    %c16_i32_14 = arith.constant 16 : i32
    %40 = arith.cmpi sle, %39, %c16_i32_14 : i32
    %41 = arith.extui %40 : i1 to i32
    %c0_i32_15 = arith.constant 0 : i32
    %42 = arith.cmpi ne, %41, %c0_i32_15 : i32
    scf.if %42 {
      %c0_17 = arith.constant 0 : index
      %c0_18 = arith.constant 0 : index
      %c0_19 = arith.constant 0 : index
      %46 = vector.load %arg4[%c0_17, %c0_18, %c0_19] : memref<1x8x128xf32, #tpu.memory_space<vmem>>, vector<1x8x128xf32>
      %47 = vector.shape_cast %46 : vector<1x8x128xf32> to vector<8x128xf32>
      %48 = vector.shape_cast %35 : vector<16x128xf32> to vector<2x8x128xf32>
      %cst_20 = arith.constant dense<0.000000e+00> : vector<8x128xf32>
      %49 = vector.multi_reduction <add>, %48, %cst_20 [0] : vector<2x8x128xf32> to vector<8x128xf32>
      %50 = arith.addf %47, %49 : vector<8x128xf32>
      %c0_21 = arith.constant 0 : index
      %c0_22 = arith.constant 0 : index
      %c0_23 = arith.constant 0 : index
      %51 = vector.load %arg4[%c0_21, %c0_22, %c0_23] : memref<1x8x128xf32, #tpu.memory_space<vmem>>, vector<1x8x128xf32>
      %52 = vector.shape_cast %51 : vector<1x8x128xf32> to vector<8x128xf32>
      %53 = vector.shape_cast %50 : vector<8x128xf32> to vector<1x8x128xf32>
      tpu.vector_store %arg4[%c0_21, %c0_22, %c0_23], %53 {strides = array<i32>} : memref<1x8x128xf32, #tpu.memory_space<vmem>>, vector<1x8x128xf32>,
    } else {
    }
    %true = arith.constant true
    %43 = arith.xori %40, %true : i1
    %44 = arith.extui %43 : i1 to i32
    %c0_i32_16 = arith.constant 0 : i32
    %45 = arith.cmpi ne, %44, %c0_i32_16 : i32
    scf.if %45 {
      %46 = tpu.iota {dimensions = array<i32: 0>} : vector<16x128xi32>
      %c16_i32_17 = arith.constant 16 : i32
      %47 = arith.muli %37, %c16_i32_17 : i32
      %48 = vector.broadcast %47 : i32 to vector<16x128xi32>
      %49 = arith.addi %48, %46 : vector<16x128xi32>
      %c16_i32_18 = arith.constant 16 : i32
      %50 = vector.broadcast %c16_i32_18 : i32 to vector<16x128xi32>
      %51 = arith.cmpi slt, %49, %50 : vector<16x128xi32>
      %c0_19 = arith.constant 0 : index
      %c0_20 = arith.constant 0 : index
      %c0_21 = arith.constant 0 : index
      %52 = vector.load %arg4[%c0_19, %c0_20, %c0_21] : memref<1x8x128xf32, #tpu.memory_space<vmem>>, vector<1x8x128xf32>
      %53 = vector.shape_cast %52 : vector<1x8x128xf32> to vector<8x128xf32>
      %cst_22 = arith.constant 0.000000e+00 : f32
      %54 = vector.broadcast %cst_22 : f32 to vector<16x128xf32>
      %55 = arith.select %51, %35, %54 : vector<16x128xi1>, vector<16x128xf32>
      %56 = vector.shape_cast %55 : vector<16x128xf32> to vector<2x8x128xf32>
      %cst_23 = arith.constant dense<0.000000e+00> : vector<8x128xf32>
      %57 = vector.multi_reduction <add>, %56, %cst_23 [0] : vector<2x8x128xf32> to vector<8x128xf32>
      %58 = arith.addf %53, %57 : vector<8x128xf32>
      %c0_24 = arith.constant 0 : index
      %c0_25 = arith.constant 0 : index
      %c0_26 = arith.constant 0 : index
      %59 = vector.load %arg4[%c0_24, %c0_25, %c0_26] : memref<1x8x128xf32, #tpu.memory_space<vmem>>, vector<1x8x128xf32>
      %60 = vector.shape_cast %59 : vector<1x8x128xf32> to vector<8x128xf32>
      %61 = vector.shape_cast %58 : vector<8x128xf32> to vector<1x8x128xf32>
      tpu.vector_store %arg4[%c0_24, %c0_25, %c0_26], %61 {strides = array<i32>} : memref<1x8x128xf32, #tpu.memory_space<vmem>>, vector<1x8x128xf32>,
    } else {
    }
    return
  }
  func.func @transform_0(%arg0: i32, %arg1: i32) -> (i32, i32) {
    %c1_i32 = arith.constant 1 : i32
    %0 = arith.muli %arg0, %c1_i32 : i32
    %1 = arith.addi %0, %arg1 : i32
    %c0_i32 = arith.constant 0 : i32
    %2 = arith.minsi %1, %c0_i32 : i32
    %c0_i32_0 = arith.constant 0 : i32
    %c0_i32_1 = arith.constant 0 : i32
    return %2, %c0_i32_0 : i32, i32
  }
  func.func @transform_1(%arg0: i32, %arg1: i32) -> (i32, i32) {
    %c1_i32 = arith.constant 1 : i32
    %0 = arith.muli %arg0, %c1_i32 : i32
    %1 = arith.addi %0, %arg1 : i32
    %c0_i32 = arith.constant 0 : i32
    %2 = arith.minsi %1, %c0_i32 : i32
    %c0_i32_0 = arith.constant 0 : i32
    %c0_i32_1 = arith.constant 0 : i32
    return %2, %c0_i32_0 : i32, i32
  }
  func.func @transform_2(%arg0: i32, %arg1: i32) -> (i32, i32, i32) {
    %c0_i32 = arith.constant 0 : i32
    %c0_i32_0 = arith.constant 0 : i32
    %c0_i32_1 = arith.constant 0 : i32
    return %arg0, %c0_i32, %c0_i32_0 : i32, i32, i32
  }
}

</mosaic_0001>

<llo_original>
// kernel: tpu_custom_call.1
$region0: #{tpu_custom_call.1}
  #allocation0 [shape = 'u32[]', space=smem, size = 0x4, offset = 0x4, fixed_abs, tag = 'smem constant byte address 0x4 - core index']
  #allocation1 [shape = 'u32[144,128]{1,0:T(1,128)}', space=vmem, size = 0x12000, scoped, tag = 'internal scratch']
  %s0 = inlined_call_operand.hbm [shape: f32[16,128], index: 0, kind: input, shape index: {}]
  %s1 = inlined_call_operand.hbm [shape: f32[16,128], index: 1, kind: input, shape index: {}]
  %s2 = inlined_call_operand.hbm [shape: f32[1,8,128], index: 2, kind: output, shape index: {}]
  %s3 = sld [smem:[#allocation0]]
  $region38: #{tpu_custom_call.1} parent=0
    _
  %s5 = ssub.s32 1, %s3
  %s6 = scalar_select 0, %s5, %s3
  $region1: #{tpu_custom_call.1} parent=0
    #allocation2 [shape = 'u8[8192]{0}', space=vmem, size = 0x2000, scoped, tag = 'input window, operand 0, single buffered']
    #allocation3 [shape = 's32[1]{0}', space=sflag, size = 0x4, scoped, tag = 'scoped memory for tpu_custom_call.1']
    #allocation4 [shape = 's32[1]{0}', space=sflag, size = 0x4, scoped, tag = 'scoped memory for tpu_custom_call.1']
    #allocation5 [shape = 'u8[8192]{0}', space=vmem, size = 0x2000, scoped, tag = 'input window, operand 1, single buffered']
    #allocation6 [shape = 's32[1]{0}', space=sflag, size = 0x4, scoped, tag = 'scoped memory for tpu_custom_call.1']
    #allocation7 [shape = 'u8[4096]{0}', space=vmem, size = 0x1000, scoped, tag = 'output window, operand 0, single buffered']
    %7 = vsyncpa [#allocation3], 0
    %8 = vsyncpa [#allocation6], 0
    %9 = vsyncpa [#allocation4], 0
    // Predicated region
    $region2: #{tpu_custom_call.1} parent=1 // pred_check
      _
    $region3: #{tpu_custom_call.1} parent=1 // pred_check_branch
      %11 = sbr.rel (0) target = $region5
    $region4: #{tpu_custom_call.1} parent=1 // pred_region
      %s12 = sadd.s32 0, 0
      %p13 = scmp.lt.s32.totalorder %s12, 0
      %s14 = scalar_select %p13, %s12, 0
      %s15 = smul.u32 2, %s14
      %s17 = ssub.s32 256, 256
      %18 = vsyncadd [#allocation3], %s17
      %s19 = smul.addr %s15, 128
      %s20 = scalar_lea.hbm %s0, %s19
      %s21 = sshll.u32 [#allocation2], 4
      %s22 = int_to_ptr.vmem [resolvable:$true] %s21
      %27 = dma.hbm_to_vmem [thread:$0]  %s20, 256, %s22, [#allocation3], 128, 128, 8
    $region5: #{tpu_custom_call.1} parent=1 // pred_fallthru
      _
    // Predicated region
    $region6: #{tpu_custom_call.1} parent=1 // pred_check
      _
    $region7: #{tpu_custom_call.1} parent=1 // pred_check_branch
      %29 = sbr.rel (0) target = $region9
    $region8: #{tpu_custom_call.1} parent=1 // pred_region
      %s30 = sadd.s32 0, 0
      %p31 = scmp.lt.s32.totalorder %s30, 0
      %s32 = scalar_select %p31, %s30, 0
      %s33 = smul.u32 2, %s32
      %s35 = ssub.s32 256, 256
      %36 = vsyncadd [#allocation6], %s35
      %s37 = smul.addr %s33, 128
      %s38 = scalar_lea.hbm %s1, %s37
      %s39 = sshll.u32 [#allocation5], 4
      %s40 = int_to_ptr.vmem [resolvable:$true] %s39
      %45 = dma.hbm_to_vmem [thread:$0]  %s38, 256, %s40, [#allocation6], 128, 128, 8
    $region9: #{tpu_custom_call.1} parent=1 // pred_fallthru
      _
    // Predicated region
    $region10: #{tpu_custom_call.1} parent=1 // pred_check
      _
    $region11: #{tpu_custom_call.1} parent=1 // pred_check_branch
      %47 = sbr.rel (0) target = $region13
    $region12: #{tpu_custom_call.1} parent=1 // pred_region
      %48 = dma.done [#allocation3], 256
    $region13: #{tpu_custom_call.1} parent=1 // pred_fallthru
      _
    // Predicated region
    $region14: #{tpu_custom_call.1} parent=1 // pred_check
      _
    $region15: #{tpu_custom_call.1} parent=1 // pred_check_branch
      %50 = sbr.rel (0) target = $region17
    $region16: #{tpu_custom_call.1} parent=1 // pred_region
      %51 = dma.done [#allocation6], 256
    $region17: #{tpu_custom_call.1} parent=1 // pred_fallthru
      _
    %s52 = sadd.s32 0, 0
    %p53 = scmp.lt.s32.totalorder %s52, 0
    %s54 = scalar_select %p53, %s52, 0
    %s55 = smul.u32 2, %s54
    %s56 = sadd.s32 0, 0
    %p57 = scmp.lt.s32.totalorder %s56, 0
    %s58 = scalar_select %p57, %s56, 0
    %s59 = smul.u32 2, %s58
    %p60 = scmp.eq.s32.totalorder 0, 0
    // Predicated region
    $region18: #{tpu_custom_call.1} parent=1 // pred_check
      %p61 = pneg %p60
    $region19: #{tpu_custom_call.1} parent=1 // pred_check_branch
      %63 = sbr.rel (%p61) target = $region21
    $region20: #{tpu_custom_call.1} parent=1 // pred_region
      %64 = vst [vmem:[#allocation7] sm:$0xff] 0.0
    $region21: #{tpu_custom_call.1} parent=1 // pred_fallthru
      _
    %v65 = vld [vmem:[#allocation2] sm:$0xff]
    %v66 = vld [vmem:[#allocation2 + $0x8] sm:$0xff]
    %v67 = vld [vmem:[#allocation5] sm:$0xff]
    %v68 = vld [vmem:[#allocation5 + $0x8] sm:$0xff]
    %v69 = vand.u32 2147483647, %v65
    %v70 = vand.u32 2147483647, %v66
    %v71 = vsub.f32 0.0, %v69
    %v72 = vsub.f32 0.0, %v70
    %v73 = vmul.f32 %v71, 1.442695
    %v74 = vpow.pop %v73
    %v75 = vmul.f32 %v72, 1.442695
    %v76 = vpow.pop %v75
    %v77 = vsub.f32 0.0, %v65
    %v78 = vsub.f32 0.0, %v66
    %v79 = vmax.f32 %v77, 0.0
    %v80 = vmax.f32 %v78, 0.0
    %v81 = vadd.f32 %v74, 1.0
    %v82 = vlog2.pop %v81
    %v83 = vmul.f32 %v82, 0.6931472
    %v84 = vmul.f32 -0.5, %v74
    %v85 = vadd.f32 %v84, 1.0
    %v86 = vmul.f32 %v85, %v74
    %v87 = vand.u32 2147483647, %v74
    %vm88 = vcmp.lt.f32.partialorder %v87, 0.0004427343
    %v89 = vsel %vm88, %v86, %v83
    %v90 = vadd.f32 %v76, 1.0
    %v91 = vlog2.pop %v90
    %v92 = vmul.f32 %v91, 0.6931472
    %v93 = vmul.f32 -0.5, %v76
    %v94 = vadd.f32 %v93, 1.0
    %v95 = vmul.f32 %v94, %v76
    %v96 = vand.u32 2147483647, %v76
    %vm97 = vcmp.lt.f32.partialorder %v96, 0.0004427343
    %v98 = vsel %vm97, %v95, %v92
    %v99 = vadd.f32 %v79, %v89
    %v100 = vadd.f32 %v80, %v98
    %v101 = vsub.f32 1.0, %v67
    %v102 = vsub.f32 1.0, %v68
    %v103 = vmul.f32 %v101, %v65
    %v104 = vmul.f32 %v102, %v66
    %v105 = vadd.f32 %v103, %v99
    %v106 = vadd.f32 %v104, %v100
    %v107 = vadd.f32 %v74, 1.0
    %v108 = vadd.f32 %v76, 1.0
    %v109 = vrcp.pop %v107
    %v110 = vmul.f32 1.0, %v109
    %v111 = vrcp.pop %v108
    %v112 = vmul.f32 1.0, %v111
    %v113 = vmul.f32 %v74, %v110
    %v114 = vmul.f32 %v76, %v112
    %vm115 = vcmp.ge.f32.partialorder %v65, 0.0
    %vm116 = vcmp.ge.f32.partialorder %v66, 0.0
    %vm117 = vcmp.gt.f32.partialorder %v67, 0.5
    %vm118 = vcmp.gt.f32.partialorder %v68, 0.5
    %vm119 = vmxor %vm115, %vm117
    %vm120 = vmxor %vm116, %vm118
    %vm121 = vmxor %vm119, 1
    %vm122 = vmxor %vm120, 1
    %v123 = vsel %vm121, %v113, %v110
    %v124 = vsel %vm122, %v114, %v112
    %v125 = vrsqrt.pop %v123
    %v126 = vmul.f32 %v123, %v125
    %vm127 = vcmp.eq.f32.partialorder %v123, inf
    %v128 = vsel %vm127, %v123, %v126
    %vm129 = vcmp.eq.f32.partialorder %v123, 0.0
    %v130 = vand.u32 %v123, 2147483648
    %v131 = vsel %vm129, %v130, %v128
    %v132 = vrsqrt.pop %v124
    %v133 = vmul.f32 %v124, %v132
    %vm134 = vcmp.eq.f32.partialorder %v124, inf
    %v135 = vsel %vm134, %v124, %v133
    %vm136 = vcmp.eq.f32.partialorder %v124, 0.0
    %v137 = vand.u32 %v124, 2147483648
    %v138 = vsel %vm136, %v137, %v135
    %v139 = vmul.f32 %v123, %v131
    %v140 = vmul.f32 %v124, %v138
    %v141 = vmul.f32 %v139, 2.0
    %v142 = vmul.f32 %v140, 2.0
    %v143 = vmul.f32 %v141, %v105
    %v144 = vmul.f32 %v142, %v106
    %s145 = sadd.s32 0, 0
    %s146 = sadd.s32 %s145, 1
    %s147 = smul.u32 %s146, 16
    %p148 = scmp.le.s32.totalorder %s147, 16
    // Predicated region
    $region22: #{tpu_custom_call.1} parent=1 // pred_check
      %p149 = pneg %p148
    $region23: #{tpu_custom_call.1} parent=1 // pred_check_branch
      %151 = sbr.rel (%p149) target = $region25
    $region24: #{tpu_custom_call.1} parent=1 // pred_region
      %v152 = vld [vmem:[#allocation7] sm:$0xff]
      %v153 = vadd.f32 %v143, %v144
      %v154 = vadd.f32 %v152, %v153
      %155 = vst [vmem:[#allocation7] sm:$0xff] %v154
    $region25: #{tpu_custom_call.1} parent=1 // pred_fallthru
      _
    %p156 = scmp.gt.s32.totalorder %s147, 16
    // Predicated region
    $region26: #{tpu_custom_call.1} parent=1 // pred_check
      %p157 = pneg %p156
    $region27: #{tpu_custom_call.1} parent=1 // pred_check_branch
      %159 = sbr.rel (%p157) target = $region29
    $region28: #{tpu_custom_call.1} parent=1 // pred_region
      %v160 = vlaneseq
      %v161 = vshrl.u32 %v160, 7
      %v162 = vadd.s32 %v161, 8
      %s163 = smul.u32 %s145, 16
      %v164 = vstv %s163
      %v165 = vadd.s32 %v164, %v161
      %v166 = vadd.s32 %v164, %v162
      %vm167 = vcmp.lt.s32.totalorder %v165, 16
      %vm168 = vcmp.lt.s32.totalorder %v166, 16
      %v169 = vld [vmem:[#allocation7] sm:$0xff]
      %v170 = vsel %vm167, %v143, 0.0
      %v171 = vsel %vm168, %v144, 0.0
      %v172 = vadd.f32 %v170, %v171
      %v173 = vadd.f32 %v169, %v172
      %174 = vst [vmem:[#allocation7] sm:$0xff] %v173
    $region29: #{tpu_custom_call.1} parent=1 // pred_fallthru
      _
    // Predicated region
    $region30: #{tpu_custom_call.1} parent=1 // pred_check
      _
    $region31: #{tpu_custom_call.1} parent=1 // pred_check_branch
      %176 = sbr.rel (0) target = $region33
    $region32: #{tpu_custom_call.1} parent=1 // pred_region
      %s178 = ssub.s32 128, 128
      %179 = vsyncadd [#allocation4], %s178
      %s181 = sshll.u32 [#allocation7], 4
      %s182 = int_to_ptr.vmem [resolvable:$true] %s181
      %184 = dma.vmem_to_hbm [thread:$0]  %s182, 128, %s2, [#allocation4]
    $region33: #{tpu_custom_call.1} parent=1 // pred_fallthru
      _
    // Predicated region
    $region34: #{tpu_custom_call.1} parent=1 // pred_check
      _
    $region35: #{tpu_custom_call.1} parent=1 // pred_check_branch
      %186 = sbr.rel (0) target = $region37
    $region36: #{tpu_custom_call.1} parent=1 // pred_region
      %187 = dma.done [#allocation4], 128
    $region37: #{tpu_custom_call.1} parent=1 // pred_fallthru
      _
    %188 = vsyncpa [#allocation3], 1
    %189 = vsyncpa [#allocation6], 1
    %190 = vsyncpa [#allocation4], 1

</llo_original>
